<compile_context>
chip_gen: v5e
topology: v5e:2x2
jax: 0.10.0
libtpu: 0.0.40
codegen_flags: <defaults>
</compile_context>

<pallas_src>
import functools
import math

import jax
import jax.numpy as jnp
import numpy as np
from jax import lax
from jax.experimental import pallas as pl
from jax.experimental.pallas import tpu as pltpu


def _cdiv(a, b):
    return (a + b - 1) // b


def _default_chunks():
    # A second grid "chunk" only buys anything on megacore (2-TC) parts.
    try:
        kind = jax.devices()[0].device_kind.lower()
        if "v7" in kind:
            return 2
    except Exception:
        pass
    return 1


def _mse_sum_kernel(a_ref, b_ref, o_ref, acc_ref, *,
                    steps, tm, tn, valid_rows, group8):
    """Accumulate sum((a - b)^2) over one chunk of row tiles.

    a_ref/b_ref: (tm, tn) tiles in their native dtype (upcast to f32 here).
    o_ref:       (1, 8, 128) lane-dense per-chunk partial sum (broadcast).
    acc_ref:     (8, tn) or (1, tn) f32 accumulator, zeroed at k == 0.
    """
    c = pl.program_id(0)
    k = pl.program_id(1)

    @pl.when(k == 0)
    def _():
        acc_ref[...] = jnp.zeros_like(acc_ref)

    d = a_ref[...].astype(jnp.float32) - b_ref[...].astype(jnp.float32)

    # Static check: does the last row-block overhang the array?  If so, mask
    # out-of-bounds rows (their VMEM contents are undefined) to zero.
    if valid_rows % tm != 0:
        row_start = (c * steps + k) * tm
        ri = lax.broadcasted_iota(jnp.int32, (tm, tn), 0)
        d = jnp.where(ri + row_start < valid_rows, d, 0.0)

    dd = d * d
    if group8:
        # Sublane-group reduce: pure VALU adds onto an (8, tn) accumulator;
        # the cross-sublane/cross-lane reduce is deferred to the finalize.
        acc_ref[...] += jnp.sum(dd.reshape(tm // 8, 8, tn), axis=0)
    else:
        acc_ref[...] += jnp.sum(dd, axis=0, keepdims=True)

    @pl.when(k == pl.num_programs(1) - 1)
    def _():
        # Lane-dense (8, 128) broadcast store of the per-chunk partial sum.
        o_ref[...] = jnp.broadcast_to(jnp.sum(acc_ref[...]), (1, 8, 128))


@functools.partial(
    jax.jit,
    static_argnames=("tn", "tile_bytes", "chunks", "min_kernel_elems"))
def adain_content_loss(x, y, *, tn=1024, tile_bytes=4 * 1024 * 1024,
                       chunks=None, min_kernel_elems=1 << 20):
    """MSE loss mean((x - y)**2): semantics of AdaINContentLoss.forward."""
    assert x.shape == y.shape, "input and target must have the same size"
    n = math.prod(x.shape)

    # Common dtype (torch promotes); no-op when dtypes already match.
    dt = jnp.promote_types(x.dtype, y.dtype)
    x = x.astype(dt)
    y = y.astype(dt)

    # Choose a lane width that divides n whenever n is a multiple of 128 so
    # the flatten + reshape below is a free (bitcast) reshape — no copies.
    tn = max(128, (tn // 128) * 128)
    if n > 0 and n % 128 == 0:
        tn_eff = 128 * math.gcd(n // 128, tn // 128)
    else:
        tn_eff = tn
    rows = n // tn_eff
    rem = n - rows * tn_eff

    # Tiny inputs: a single XLA fusion beats kernel-launch + tiling overhead.
    if n < min_kernel_elems or rows == 0:
        d = x.astype(jnp.float32) - y.astype(jnp.float32)
        return jnp.mean(d * d)

    xf = x.reshape(-1)
    yf = y.reshape(-1)
    if rem == 0:
        xm = xf.reshape(rows, tn_eff)
        ym = yf.reshape(rows, tn_eff)
        tail = None
    else:
        # Rare case (n not a multiple of 128): handle the < tn-element tail in
        # plain jnp.  The prefix slice may materialize a copy, but only then.
        main = rows * tn_eff
        xm = xf[:main].reshape(rows, tn_eff)
        ym = yf[:main].reshape(rows, tn_eff)
        dtail = xf[main:].astype(jnp.float32) - yf[main:].astype(jnp.float32)
        tail = jnp.sum(dtail * dtail)

    # Row-tile size: ~tile_bytes per operand per step, rounded to the packed
    # sublane multiple of the streamed dtype (f32: 8, bf16: 16, int8: 32).
    itemsize = jnp.dtype(dt).itemsize
    sublane = max(8, 32 // itemsize)
    tm_target = max(sublane, tile_bytes // (tn_eff * itemsize))
    if rows <= tm_target:
        tm_eff = rows                      # single full-height block
    else:
        tm_eff = (tm_target // sublane) * sublane

    row_blocks = _cdiv(rows, tm_eff)
    if chunks is None:
        chunks = _default_chunks()
    n_chunks = max(1, math.gcd(int(chunks), row_blocks))
    steps = row_blocks // n_chunks
    group8 = (tm_eff % 8 == 0) and tm_eff >= 8
    acc_rows = 8 if group8 else 1

    kernel = functools.partial(_mse_sum_kernel, steps=steps, tm=tm_eff,
                               tn=tn_eff, valid_rows=rows, group8=group8)

    streamed_bytes = 2 * rows * tn_eff * itemsize + n_chunks * 8 * 128 * 4
    partials = pl.pallas_call(
        kernel,
        out_shape=jax.ShapeDtypeStruct((n_chunks, 8, 128), jnp.float32),
        grid_spec=pltpu.PrefetchScalarGridSpec(
            num_scalar_prefetch=0,
            grid=(n_chunks, steps),
            in_specs=[
                pl.BlockSpec((tm_eff, tn_eff), lambda c, k: (c * steps + k, 0)),
                pl.BlockSpec((tm_eff, tn_eff), lambda c, k: (c * steps + k, 0)),
            ],
            out_specs=pl.BlockSpec((1, 8, 128), lambda c, k: (c, 0, 0)),
            scratch_shapes=[pltpu.VMEM((acc_rows, tn_eff), jnp.float32)],
        ),
        compiler_params=pltpu.CompilerParams(
            dimension_semantics=("parallel", "arbitrary"),
            vmem_limit_bytes=48 * 1024 * 1024),
        cost_estimate=pl.CostEstimate(flops=3 * rows * tn_eff,
                                      transcendentals=0,
                                      bytes_accessed=streamed_bytes),
    )(xm, ym)

    # All lanes of each chunk tile hold the same per-chunk partial sum.
    total = jnp.sum(partials[:, 0, 0])
    if tail is not None:
        total = total + tail
    return total / n


if __name__ == "__main__":
    key = jax.random.PRNGKey(0)
    k1, k2, k3, k4 = jax.random.split(key, 4)

    def check(x, y, loss, name):
        ref = jnp.mean((x.astype(jnp.float32) - y.astype(jnp.float32)) ** 2)
        if not np.allclose(np.asarray(loss, np.float32),
                           np.asarray(ref, np.float32),
                           rtol=1e-5, atol=1e-7):
            raise AssertionError(
                f"{name}: got {float(loss)}, expected {float(ref)}")

    # (A) f32, tile-aligned size, kernel path forced (min_kernel_elems=0).
    shape = (2, 4, 16, 16)
    x = jax.random.uniform(k1, shape, dtype=jnp.float32)
    y = jax.random.uniform(k2, shape, dtype=jnp.float32)
    loss_a = jax.block_until_ready(adain_content_loss(x, y, min_kernel_elems=0))
    check(x, y, loss_a, "f32/aligned")

    # (B) f32, multi-block grid with in-kernel row-overhang masking
    #     (small tiles forced via tn / tile_bytes to exercise the path).
    shape_b = (2, 4, 16, 17)          # 2176 = 17 * 128 elements
    xb = jax.random.uniform(k3, shape_b, dtype=jnp.float32)
    yb = jax.random.uniform(k4, shape_b, dtype=jnp.float32)
    loss_b = jax.block_until_ready(
        adain_content_loss(xb, yb, tn=128, tile_bytes=4096, min_kernel_elems=0))
    check(xb, yb, loss_b, "f32/masked-multiblock")

    # (C) bf16 inputs streamed natively, upcast inside the kernel.
    xc = x.astype(jnp.bfloat16)
    yc = y.astype(jnp.bfloat16)
    loss_c = jax.block_until_ready(adain_content_loss(xc, yc, min_kernel_elems=0))
    check(xc, yc, loss_c, "bf16/aligned")

    # (D) default small-input fast path (plain jnp, no kernel launch).
    loss_d = jax.block_until_ready(adain_content_loss(x, y))
    check(x, y, loss_d, "small-input fallback")

    print("KERNEL_OK")
</pallas_src>

<mosaic_0001>
module attributes {stable_mosaic.version = 11 : i64} {
  func.func @_mse_sum_kernel(%arg0: i32, %arg1: i32, %arg2: memref<2x1024xf32, #tpu.memory_space<vmem>>, %arg3: memref<2x1024xf32, #tpu.memory_space<vmem>>, %arg4: memref<1x8x128xf32, #tpu.memory_space<vmem>>, %arg5: memref<1x1024xf32, #tpu.memory_space<vmem>>) attributes {dimension_semantics = [#tpu.dimension_semantics<parallel>, #tpu.dimension_semantics<arbitrary>], iteration_bounds = array<i64: 1, 1>, scalar_prefetch = 0 : i64, scratch_operands = 1 : i64, tpu.core_type = #tpu.core_type<tc>, window_params = [{transform_indices = @transform_0, window_bounds = array<i64: 2, 1024>}, {transform_indices = @transform_1, window_bounds = array<i64: 2, 1024>}, {transform_indices = @transform_2, window_bounds = array<i64: 1, 8, 128>}]} {
    %c0_i32 = arith.constant 0 : i32
    %0 = arith.cmpi eq, %arg1, %c0_i32 : i32
    %1 = arith.extui %0 : i1 to i32
    %c0_i32_0 = arith.constant 0 : i32
    %2 = arith.cmpi ne, %1, %c0_i32_0 : i32
    scf.if %2 {
      %cst_10 = arith.constant 0.000000e+00 : f32
      %15 = vector.broadcast %cst_10 : f32 to vector<1x1024xf32>
      %c0_11 = arith.constant 0 : index
      %c0_12 = arith.constant 0 : index
      %16 = vector.load %arg5[%c0_11, %c0_12] : memref<1x1024xf32, #tpu.memory_space<vmem>>, vector<1x1024xf32>
      tpu.vector_store %arg5[%c0_11, %c0_12], %15 {strides = array<i32>} : memref<1x1024xf32, #tpu.memory_space<vmem>>, vector<1x1024xf32>,
    } else {
    }
    %c0 = arith.constant 0 : index
    %c0_1 = arith.constant 0 : index
    %3 = vector.load %arg2[%c0, %c0_1] : memref<2x1024xf32, #tpu.memory_space<vmem>>, vector<2x1024xf32>
    %c0_2 = arith.constant 0 : index
    %c0_3 = arith.constant 0 : index
    %4 = vector.load %arg3[%c0_2, %c0_3] : memref<2x1024xf32, #tpu.memory_space<vmem>>, vector<2x1024xf32>
    %5 = arith.subf %3, %4 : vector<2x1024xf32>
    %6 = arith.mulf %5, %5 : vector<2x1024xf32>
    %c0_4 = arith.constant 0 : index
    %c0_5 = arith.constant 0 : index
    %7 = vector.load %arg5[%c0_4, %c0_5] : memref<1x1024xf32, #tpu.memory_space<vmem>>, vector<1x1024xf32>
    %cst = arith.constant dense<0.000000e+00> : vector<1024xf32>
    %8 = vector.multi_reduction <add>, %6, %cst [0] : vector<2x1024xf32> to vector<1024xf32>
    %9 = vector.shape_cast %8 : vector<1024xf32> to vector<1x1024xf32>
    %10 = arith.addf %7, %9 : vector<1x1024xf32>
    %c0_6 = arith.constant 0 : index
    %c0_7 = arith.constant 0 : index
    %11 = vector.load %arg5[%c0_6, %c0_7] : memref<1x1024xf32, #tpu.memory_space<vmem>>, vector<1x1024xf32>
    tpu.vector_store %arg5[%c0_6, %c0_7], %10 {strides = array<i32>} : memref<1x1024xf32, #tpu.memory_space<vmem>>, vector<1x1024xf32>,
    %c0_i32_8 = arith.constant 0 : i32
    %12 = arith.cmpi eq, %arg1, %c0_i32_8 : i32
    %13 = arith.extui %12 : i1 to i32
    %c0_i32_9 = arith.constant 0 : i32
    %14 = arith.cmpi ne, %13, %c0_i32_9 : i32
    scf.if %14 {
      %c0_10 = arith.constant 0 : index
      %c0_11 = arith.constant 0 : index
      %15 = vector.load %arg5[%c0_10, %c0_11] : memref<1x1024xf32, #tpu.memory_space<vmem>>, vector<1x1024xf32>
      %16 = vector.shape_cast %15 : vector<1x1024xf32> to vector<1x1x1024xf32>
      %cst_12 = arith.constant dense<0.000000e+00> : vector<1xf32>
      %17 = vector.multi_reduction <add>, %16, %cst_12 [1, 2] : vector<1x1x1024xf32> to vector<1xf32>
      %18 = vector.shape_cast %17 : vector<1xf32> to vector<1x1x1xf32>
      %19 = vector.extract %18[0, 0, 0] : f32 from vector<1x1x1xf32>
      %20 = vector.broadcast %19 : f32 to vector<1x8x128xf32>
      %c0_13 = arith.constant 0 : index
      %c0_14 = arith.constant 0 : index
      %c0_15 = arith.constant 0 : index
      %21 = vector.load %arg4[%c0_13, %c0_14, %c0_15] : memref<1x8x128xf32, #tpu.memory_space<vmem>>, vector<1x8x128xf32>
      tpu.vector_store %arg4[%c0_13, %c0_14, %c0_15], %20 {strides = array<i32>} : memref<1x8x128xf32, #tpu.memory_space<vmem>>, vector<1x8x128xf32>,
    } else {
    }
    return
  }
  func.func @transform_0(%arg0: i32, %arg1: i32) -> (i32, i32) {
    %c1_i32 = arith.constant 1 : i32
    %0 = arith.muli %arg0, %c1_i32 : i32
    %1 = arith.addi %0, %arg1 : i32
    %c0_i32 = arith.constant 0 : i32
    %c0_i32_0 = arith.constant 0 : i32
    return %1, %c0_i32 : i32, i32
  }
  func.func @transform_1(%arg0: i32, %arg1: i32) -> (i32, i32) {
    %c1_i32 = arith.constant 1 : i32
    %0 = arith.muli %arg0, %c1_i32 : i32
    %1 = arith.addi %0, %arg1 : i32
    %c0_i32 = arith.constant 0 : i32
    %c0_i32_0 = arith.constant 0 : i32
    return %1, %c0_i32 : i32, i32
  }
  func.func @transform_2(%arg0: i32, %arg1: i32) -> (i32, i32, i32) {
    %c0_i32 = arith.constant 0 : i32
    %c0_i32_0 = arith.constant 0 : i32
    %c0_i32_1 = arith.constant 0 : i32
    return %arg0, %c0_i32, %c0_i32_0 : i32, i32, i32
  }
}

</mosaic_0001>

<llo_original>
// kernel: adain_content_loss.1
$region0: #{adain_content_loss.1}
  #allocation0 [shape = 'u32[]', space=smem, size = 0x4, offset = 0x4, fixed_abs, tag = 'smem constant byte address 0x4 - core index']
  #allocation1 [shape = 'u32[72,128]{1,0:T(1,128)}', space=vmem, size = 0x9000, scoped, tag = 'internal scratch']
  #allocation2 [shape = 'f32[1,1024]{1,0:T(1,128)}', space=vmem, size = 0x1000, scoped, tag = 'scratch operand']
  %s0 = inlined_call_operand.vmem [shape: f32[2,1024], index: 0, kind: input, shape index: {}]
  %s1 = inlined_call_operand.vmem [shape: f32[2,1024], index: 1, kind: input, shape index: {}]
  %s2 = inlined_call_operand.vmem [shape: f32[1,8,128], index: 2, kind: output, shape index: {}]
  %s3 = sld [smem:[#allocation0]]
  $region26: #{adain_content_loss.1} parent=0
    _
  %s5 = ssub.s32 1, %s3
  %s6 = scalar_select 0, %s5, %s3
  // Predicated region
  $region2: #{adain_content_loss.1} parent=0 // pred_check
    _
  $region3: #{adain_content_loss.1} parent=0 // pred_check_branch
    %8 = sbr.rel (0) target = $region5
  $region4: #{adain_content_loss.1} parent=0 // pred_region
    %s9 = sadd.s32 0, 0
    %p10 = scmp.lt.s32.totalorder %s9, 0
    %s11 = scalar_select %p10, %s9, 0
    %s12 = smul.addr %s11, 8
    %s13 = smul.addr %s12, 2
    %s14 = scalar_lea.vmem %s0, %s13
    %s15 = sadd.s32 0, 0
  $region5: #{adain_content_loss.1} parent=0 // pred_fallthru
    _
  // Predicated region
  $region6: #{adain_content_loss.1} parent=0 // pred_check
    _
  $region7: #{adain_content_loss.1} parent=0 // pred_check_branch
    %17 = sbr.rel (0) target = $region9
  $region8: #{adain_content_loss.1} parent=0 // pred_region
    %s18 = sadd.s32 0, 0
    %p19 = scmp.lt.s32.totalorder %s18, 0
    %s20 = scalar_select %p19, %s18, 0
    %s21 = smul.addr %s20, 8
    %s22 = smul.addr %s21, 2
    %s23 = scalar_lea.vmem %s1, %s22
    %s24 = sadd.s32 0, 0
  $region9: #{adain_content_loss.1} parent=0 // pred_fallthru
    _
  %s25 = sadd.s32 0, 0
  %p26 = scmp.lt.s32.totalorder %s25, 0
  %s27 = scalar_select %p26, %s25, 0
  %s28 = smul.addr %s27, 8
  %s29 = smul.addr %s28, 2
  %s30 = scalar_lea.vmem %s0, %s29
  %s31 = sadd.s32 0, 0
  %p32 = scmp.lt.s32.totalorder %s31, 0
  %s33 = scalar_select %p32, %s31, 0
  %s34 = smul.addr %s33, 8
  %s35 = smul.addr %s34, 2
  %s36 = scalar_lea.vmem %s1, %s35
  %s37 = sadd.s32 0, 0
  %p38 = scmp.lt.s32.totalorder %s37, 0
  %s39 = scalar_select %p38, %s37, 0
  %s40 = smul.addr %s39, 8
  %s41 = smul.addr %s40, 2
  %s42 = scalar_lea.vmem %s0, %s41
  %s43 = sadd.s32 0, 0
  %s44 = sadd.s32 0, 0
  %p45 = scmp.lt.s32.totalorder %s44, 0
  %s46 = scalar_select %p45, %s44, 0
  %s47 = smul.addr %s46, 8
  %s48 = smul.addr %s47, 2
  %s49 = scalar_lea.vmem %s1, %s48
  %s50 = sadd.s32 0, 0
  %p51 = scmp.eq.s32.totalorder 0, 0
  // Predicated region
  $region10: #{adain_content_loss.1} parent=0 // pred_check
    %p52 = pneg %p51
  $region11: #{adain_content_loss.1} parent=0 // pred_check_branch
    %54 = sbr.rel (%p52) target = $region13
  $region12: #{adain_content_loss.1} parent=0 // pred_region
    %55 = vst [vmem:[#allocation2] sm:$0xff] 0.0
  $region13: #{adain_content_loss.1} parent=0 // pred_fallthru
    _
  %v56 = vld [vmem:[%s42] sm:$0xff]
  %v57 = vld [vmem:[%s42 + $0x8] sm:$0xff]
  %v58 = vld [vmem:[%s49] sm:$0xff]
  %v59 = vld [vmem:[%s49 + $0x8] sm:$0xff]
  %v60 = vsub.f32 %v56, %v58
  %v61 = vsub.f32 %v57, %v59
  %v62 = vmul.f32 %v60, %v60
  %v63 = vmul.f32 %v61, %v61
  %v64 = vld [vmem:[#allocation2] sm:$0xff]
  %67 = vst [vmem:[#allocation1] ss:$4 sm:$0xff] %v62
  %s68 = scalar_lea.vmem [#allocation1], 32
  %69 = vst [vmem:[%s68] ss:$4 sm:$0xff] %v63
  %v70 = vld.sshfl [vmem:[#allocation1] sm:$0xff pattern:$0x73625140]
  %v71 = vld.sshfl [vmem:[#allocation1 + $0x8] sm:$0xff pattern:$0x73625140]
  %v72 = vld.sshfl [vmem:[#allocation1 + $0x10] sm:$0xff pattern:$0x73625140]
  %v73 = vld.sshfl [vmem:[#allocation1 + $0x18] sm:$0xff pattern:$0x73625140]
  %v74 = vld.sshfl [vmem:[#allocation1 + $0x20] sm:$0xff pattern:$0x73625140]
  %v75 = vld.sshfl [vmem:[#allocation1 + $0x28] sm:$0xff pattern:$0x73625140]
  %v76 = vld.sshfl [vmem:[#allocation1 + $0x30] sm:$0xff pattern:$0x73625140]
  %v77 = vld.sshfl [vmem:[#allocation1 + $0x38] sm:$0xff pattern:$0x73625140]
  %vm86 = vcmask 1041408
  %v87 = vsel %vm86, %v70, 0.0
  %v88 = vrot.slane %v87, 4
  %v89 = vadd.f32 %v87, %v88
  %v90 = vrot.slane %v89, 2
  %v91 = vadd.f32 %v89, %v90
  %v92 = vrot.slane %v91, 1
  %v93 = vadd.f32 %v91, %v92
  %v94 = vsel %vm86, %v71, 0.0
  %v95 = vrot.slane %v94, 4
  %v96 = vadd.f32 %v94, %v95
  %v97 = vrot.slane %v96, 2
  %v98 = vadd.f32 %v96, %v97
  %v99 = vrot.slane %v98, 1
  %v100 = vadd.f32 %v98, %v99
  %v101 = vsel %vm86, %v72, 0.0
  %v102 = vrot.slane %v101, 4
  %v103 = vadd.f32 %v101, %v102
  %v104 = vrot.slane %v103, 2
  %v105 = vadd.f32 %v103, %v104
  %v106 = vrot.slane %v105, 1
  %v107 = vadd.f32 %v105, %v106
  %v108 = vsel %vm86, %v73, 0.0
  %v109 = vrot.slane %v108, 4
  %v110 = vadd.f32 %v108, %v109
  %v111 = vrot.slane %v110, 2
  %v112 = vadd.f32 %v110, %v111
  %v113 = vrot.slane %v112, 1
  %v114 = vadd.f32 %v112, %v113
  %v115 = vsel %vm86, %v74, 0.0
  %v116 = vrot.slane %v115, 4
  %v117 = vadd.f32 %v115, %v116
  %v118 = vrot.slane %v117, 2
  %v119 = vadd.f32 %v117, %v118
  %v120 = vrot.slane %v119, 1
  %v121 = vadd.f32 %v119, %v120
  %v122 = vsel %vm86, %v75, 0.0
  %v123 = vrot.slane %v122, 4
  %v124 = vadd.f32 %v122, %v123
  %v125 = vrot.slane %v124, 2
  %v126 = vadd.f32 %v124, %v125
  %v127 = vrot.slane %v126, 1
  %v128 = vadd.f32 %v126, %v127
  %v129 = vsel %vm86, %v76, 0.0
  %v130 = vrot.slane %v129, 4
  %v131 = vadd.f32 %v129, %v130
  %v132 = vrot.slane %v131, 2
  %v133 = vadd.f32 %v131, %v132
  %v134 = vrot.slane %v133, 1
  %v135 = vadd.f32 %v133, %v134
  %v136 = vsel %vm86, %v77, 0.0
  %v137 = vrot.slane %v136, 4
  %v138 = vadd.f32 %v136, %v137
  %v139 = vrot.slane %v138, 2
  %v140 = vadd.f32 %v138, %v139
  %v141 = vrot.slane %v140, 1
  %v142 = vadd.f32 %v140, %v141
  %v151 = vrot.slane %v100, 7
  %v152 = vrot.slane %v107, 6
  %v153 = vrot.slane %v114, 5
  %v154 = vrot.slane %v121, 4
  %v155 = vrot.slane %v128, 3
  %v156 = vrot.slane %v135, 2
  %v157 = vrot.slane %v142, 1
  %vm158 = vcmask 1040384
  %v159 = vsel %vm158, %v93, %v151
  %vm160 = vcmask 1042434
  %v161 = vsel %vm160, %v152, %v153
  %v162 = vsel %vm86, %v159, %v161
  %vm163 = vcmask 1044484
  %v164 = vsel %vm163, %v154, %v155
  %vm165 = vcmask 1046534
  %v166 = vsel %vm165, %v156, %v157
  %vm167 = vcmask 1045508
  %v168 = vsel %vm167, %v164, %v166
  %vm169 = vcmask 1043456
  %v170 = vsel %vm169, %v162, %v168
  %v172 = vadd.f32 %v64, %v170
  %173 = vst [vmem:[#allocation2] sm:$0xff] %v172
  // Predicated region
  $region14: #{adain_content_loss.1} parent=0 // pred_check
    %p174 = pneg %p51
  $region15: #{adain_content_loss.1} parent=0 // pred_check_branch
    %176 = sbr.rel (%p174) target = $region17
  $region16: #{adain_content_loss.1} parent=0 // pred_region
    %v177 = vld [vmem:[#allocation2] sm:$0xff]
    %v179 = vperm.slane %v177, 0
    %v180 = vperm.slane %v177, 1
    %v181 = vperm.slane %v177, 2
    %v182 = vperm.slane %v177, 3
    %v183 = vperm.slane %v177, 4
    %v184 = vperm.slane %v177, 5
    %v185 = vperm.slane %v177, 6
    %v186 = vperm.slane %v177, 7
    %v195 = vsel %vm158, %v179, 0.0
    %v196 = vsel %vm158, %v180, 0.0
    %v197 = vadd.f32 %v195, %v196
    %v198 = vsel %vm158, %v181, 0.0
    %v199 = vadd.f32 %v197, %v198
    %v200 = vsel %vm158, %v182, 0.0
    %v201 = vadd.f32 %v199, %v200
    %v202 = vsel %vm158, %v183, 0.0
    %v203 = vadd.f32 %v201, %v202
    %v204 = vsel %vm158, %v184, 0.0
    %v205 = vadd.f32 %v203, %v204
    %v206 = vsel %vm158, %v185, 0.0
    %v207 = vadd.f32 %v205, %v206
    %v208 = vsel %vm158, %v186, 0.0
    %v209 = vadd.f32 %v207, %v208
    %210 = vadd.xlane.f32.xlu0 %v209
    %v211 = vpop.xlane.xlu0 %210
    %v212 = vrot.slane %v211, 4
    %v213 = vadd.f32 %v211, %v212
    %v214 = vrot.slane %v213, 2
    %v215 = vadd.f32 %v213, %v214
    %v216 = vrot.slane %v215, 1
    %v217 = vadd.f32 %v215, %v216
    %s218 = vtos %v217
    %v219 = vstv %s218
    %220 = vst [vmem:[%s2] sm:$0xff] %v219
  $region17: #{adain_content_loss.1} parent=0 // pred_fallthru
    _
  // Predicated region
  $region18: #{adain_content_loss.1} parent=0 // pred_check
    _
  $region19: #{adain_content_loss.1} parent=0 // pred_check_branch
    %222 = sbr.rel (0) target = $region21
  $region20: #{adain_content_loss.1} parent=0 // pred_region
    _
  $region21: #{adain_content_loss.1} parent=0 // pred_fallthru
    _
  // Predicated region
  $region22: #{adain_content_loss.1} parent=0 // pred_check
    _
  $region23: #{adain_content_loss.1} parent=0 // pred_check_branch
    %224 = sbr.rel (0) target = $region25
  $region24: #{adain_content_loss.1} parent=0 // pred_region
    _
  $region25: #{adain_content_loss.1} parent=0 // pred_fallthru
    _

</llo_original>
